<compile_context>
chip_gen: v5e
topology: v5e:2x2
jax: 0.10.0
libtpu: 0.0.40
codegen_flags: <defaults>
</compile_context>

<pallas_src>
import jax
import jax.numpy as jnp
from jax.experimental import pallas as pl
from jax.experimental.pallas import tpu as pltpu

N = 16                 # length of the "flag" vector (n in the original script)
NP = N + 1             # conv output spatial size: (16 + 2*1 - 2) + 1 = 17
OUT_FLAT = NP * NP     # 289 valid output elements (row-major 17x17)
LANE_OUT = 384         # lane-padded output width (multiple of 128, >= 289)
M_ROWS = 8             # sublane-aligned row count of the matmul / output slab


def fused_affine_kernel(x_ref, w_ref, b_ref, o_ref):
    """Entire Net collapsed to one affine map:  out = x @ W_eff + B_eff.

    x_ref: (1, N)            f32 VMEM  input vector
    w_ref: (N, LANE_OUT)     f32 VMEM  folded (linear ∘ conv) weight
    b_ref: (M_ROWS, LANE_OUT) f32 VMEM folded (linear bias ∘ conv ∘ conv bias)
    o_ref: (M_ROWS, LANE_OUT) f32 VMEM lane-dense output; valid: row 0, lanes [0:289]
    """
    lhs = jnp.broadcast_to(x_ref[...], (M_ROWS, N))           # sublane broadcast, 8x16
    o_ref[...] = (
        jnp.dot(lhs, w_ref[...], preferred_element_type=jnp.float32) + b_ref[...]
    )


def make_net_forward(lin_w, lin_b, conv_w, conv_b):
    """One-time parameter fold (runs outside the jitted per-call path).

    lin_w: (N*N, N) torch Linear weight layout; lin_b: (N*N,);
    conv_w: (1, 1, 2, 2); conv_b: (1,).
    Returns a jitted forward(x) -> (1, 1, 17, 17).
    """
    lin_w = jnp.asarray(lin_w, jnp.float32)
    lin_b = jnp.asarray(lin_b, jnp.float32)
    cw = jnp.asarray(conv_w, jnp.float32).reshape(2, 2)
    cb = jnp.asarray(conv_b, jnp.float32).reshape(())

    # Linear as an image-valued map: I[i, j] = sum_k W_img[i, j, k] x[k] + b_img[i, j]
    w_img = lin_w.reshape(N, N, N)                       # [i, j, k]
    b_img = lin_b.reshape(N, N)

    # Zero padding of the 2x2 / padding=1 cross-correlation, folded analytically:
    # O[r, c] = sum_{di,dj} cw[di,dj] * P[r+di, c+dj] + cb,  P = pad(I, 1)
    wp = jnp.pad(w_img, ((1, 1), (1, 1), (0, 0)))        # (18, 18, N)
    bp = jnp.pad(b_img, ((1, 1), (1, 1)))                # (18, 18)

    A = jnp.zeros((NP, NP, N), jnp.float32)              # O[r,c] = sum_k A[r,c,k] x[k] + B[r,c]
    B = jnp.full((NP, NP), cb, jnp.float32)
    for di in range(2):
        for dj in range(2):
            A = A + cw[di, dj] * wp[di:di + NP, dj:dj + NP, :]
            B = B + cw[di, dj] * bp[di:di + NP, dj:dj + NP]

    # Lane-flattened, lane-padded effective operands (precomputed device constants).
    w_eff = jnp.zeros((N, LANE_OUT), jnp.float32)
    w_eff = w_eff.at[:, :OUT_FLAT].set(A.reshape(OUT_FLAT, N).T)      # (16, 384)
    b_eff = jnp.zeros((M_ROWS, LANE_OUT), jnp.float32)
    b_eff = b_eff.at[:, :OUT_FLAT].set(
        jnp.broadcast_to(B.reshape(1, OUT_FLAT), (M_ROWS, OUT_FLAT))
    )                                                                  # (8, 384)
    w_eff = jax.device_put(w_eff)
    b_eff = jax.device_put(b_eff)

    flops = 2 * M_ROWS * N * LANE_OUT
    bytes_accessed = 4 * (N + N * LANE_OUT + 2 * M_ROWS * LANE_OUT)
    kernel_call = pl.pallas_call(
        fused_affine_kernel,
        out_shape=jax.ShapeDtypeStruct((M_ROWS, LANE_OUT), jnp.float32),
        in_specs=[
            pl.BlockSpec(memory_space=pltpu.MemorySpace.VMEM),   # x (1, 16)
            pl.BlockSpec(memory_space=pltpu.MemorySpace.VMEM),   # W_eff (16, 384)
            pl.BlockSpec(memory_space=pltpu.MemorySpace.VMEM),   # B_eff (8, 384)
        ],
        out_specs=pl.BlockSpec(memory_space=pltpu.MemorySpace.VMEM),
        cost_estimate=pl.CostEstimate(
            flops=flops, transcendentals=0, bytes_accessed=bytes_accessed
        ),
    )

    @jax.jit
    def forward(x):
        x2 = x.reshape(1, N).astype(jnp.float32)
        slab = kernel_call(x2, w_eff, b_eff)
        # Contiguous lane-flattened row -> NCHW (1, 1, 17, 17)
        return slab[0, :OUT_FLAT].reshape(1, 1, NP, NP)

    return forward


def ref_forward(x, lin_w, lin_b, conv_w, conv_b):
    """Pure-JAX reference matching the PyTorch semantics."""
    y = x @ lin_w.T + lin_b
    img = y.reshape(1, 1, N, N)
    out = jax.lax.conv_general_dilated(
        img,
        conv_w,
        window_strides=(1, 1),
        padding=((1, 1), (1, 1)),
        dimension_numbers=("NCHW", "OIHW", "NCHW"),
    )
    return out + conv_b.reshape(1, 1, 1, 1)


if __name__ == "__main__":
    key = jax.random.PRNGKey(0)
    k_x, k_w, k_b, k_cw, k_cb = jax.random.split(key, 5)

    # "flag"-like input: small integer byte values as float32, length N
    x = jax.random.randint(k_x, (N,), 32, 127).astype(jnp.float32)

    # Deterministic synthetic parameters (same shapes as nn.Linear / nn.Conv2d)
    lin_w = jax.random.uniform(k_w, (N * N, N), jnp.float32, -0.25, 0.25)
    lin_b = jax.random.uniform(k_b, (N * N,), jnp.float32, -0.25, 0.25)
    conv_w = jax.random.uniform(k_cw, (1, 1, 2, 2), jnp.float32, -0.5, 0.5)
    conv_b = jax.random.uniform(k_cb, (1,), jnp.float32, -0.5, 0.5)

    forward = make_net_forward(lin_w, lin_b, conv_w, conv_b)   # one-time fold
    out = jax.block_until_ready(forward(x))

    ref = ref_forward(x, lin_w, lin_b, conv_w, conv_b)
    assert out.shape == (1, 1, NP, NP), out.shape
    assert jnp.allclose(out, ref, atol=1e-2, rtol=1e-3), float(
        jnp.max(jnp.abs(out - ref))
    )

    print("KERNEL_OK")
</pallas_src>

<mosaic_0001>
module attributes {stable_mosaic.version = 11 : i64} {
  func.func @fused_affine_kernel(%arg0: memref<1x16xf32, #tpu.memory_space<vmem>>, %arg1: memref<16x384xf32, #tpu.memory_space<vmem>>, %arg2: memref<8x384xf32, #tpu.memory_space<vmem>>, %arg3: memref<8x384xf32, #tpu.memory_space<vmem>>) attributes {dimension_semantics = [], scalar_prefetch = 0 : i64, scratch_operands = 0 : i64, tpu.core_type = #tpu.core_type<tc>} {
    %c0 = arith.constant 0 : index
    %c0_0 = arith.constant 0 : index
    %0 = vector.load %arg0[%c0, %c0_0] : memref<1x16xf32, #tpu.memory_space<vmem>>, vector<1x16xf32>
    %1 = vector.shape_cast %0 : vector<1x16xf32> to vector<1x16xf32>
    %2 = vector.broadcast %1 : vector<1x16xf32> to vector<8x16xf32>
    %c0_1 = arith.constant 0 : index
    %c0_2 = arith.constant 0 : index
    %3 = vector.load %arg1[%c0_1, %c0_2] : memref<16x384xf32, #tpu.memory_space<vmem>>, vector<16x384xf32>
    %cst = arith.constant dense<0.000000e+00> : vector<8x384xf32>
    %4 = tpu.matmul %2, %3, %cst {dimension_numbers = #tpu.dot_dimension_numbers<[1], [0], [0], [1], [0, 0, 1, 1], [], []>} : vector<8x16xf32>, vector<16x384xf32>, vector<8x384xf32> -> vector<8x384xf32>
    %c0_3 = arith.constant 0 : index
    %c0_4 = arith.constant 0 : index
    %5 = vector.load %arg2[%c0_3, %c0_4] : memref<8x384xf32, #tpu.memory_space<vmem>>, vector<8x384xf32>
    %6 = arith.addf %4, %5 : vector<8x384xf32>
    %c0_5 = arith.constant 0 : index
    %c0_6 = arith.constant 0 : index
    %7 = vector.load %arg3[%c0_5, %c0_6] : memref<8x384xf32, #tpu.memory_space<vmem>>, vector<8x384xf32>
    tpu.vector_store %arg3[%c0_5, %c0_6], %6 {strides = array<i32>} : memref<8x384xf32, #tpu.memory_space<vmem>>, vector<8x384xf32>,
    return
  }
}

</mosaic_0001>

<llo_original>
// kernel: squeeze.0
$region0: #{squeeze.0}
  %s0 = inlined_call_operand.vmem [shape: f32[289], index: 0, kind: input, shape index: {}]
  %s1 = inlined_call_operand.hbm [shape: f32[1,1,17,17], index: 1, kind: output, shape index: {}]
  $region1: #{squeeze.0} parent=0
    #allocation0 [shape = 'u8[8704]{0}', space=vmem, size = 0x2400, scoped, tag = 'operand span for operand 1']
    #allocation1 [shape = 's32[1]{0}', space=sflag, size = 0x4, scoped, tag = 'scoped memory for squeeze.0']
    #allocation2 [shape = 'u8[69632]{0}', space=vmem, size = 0x11000, scoped, tag = 'scoped mem for output reshape']
    #allocation3 [shape = 'u8[4096]{0}', space=vmem, size = 0x1000, scoped, tag = 'scoped mem for input reshape']
    %2 = vsyncpa [#allocation1], 0
    %s4 = ssub.s32 16, 1
    %v5 = vld [vmem:[%s0] sm:%s4]
    %6 = vst [vmem:[#allocation3] sm:%s4] %v5
    %v7 = vld [vmem:[#allocation3] sm:$0x1]
    %vm8 = vcmask 138240
    %9 = vst.msk [vmem:[#allocation2] sm:$0x1] %vm8, %v7
    %s10 = scalar_lea.vmem [#allocation3], 1
    %v11 = vld [vmem:[%s10] sm:$0x1]
    %12 = vrot.lane.b32.xlu0 %v11, 120
    %v13 = vpop.permute.xlu0 %12
    %vm14 = vcmask 138240
    %s15 = scalar_lea.vmem [#allocation2], 64
    %16 = vst.msk [vmem:[%s15] sm:$0x1] %vm14, %v13
    %s17 = scalar_lea.vmem [#allocation3], 2
    %v18 = vld [vmem:[%s17] sm:$0x1]
    %19 = vrot.lane.b32.xlu0 %v18, 112
    %v20 = vpop.permute.xlu0 %19
    %vm21 = vcmask 138240
    %s22 = scalar_lea.vmem [#allocation2], 128
    %23 = vst.msk [vmem:[%s22] sm:$0x1] %vm21, %v20
    %v24 = vld [vmem:[#allocation3] sm:$0x1]
    %25 = vrot.lane.b32.xlu0 %v24, 111
    %v26 = vpop.permute.xlu0 %25
    %vm27 = vcmask 138240
    %s28 = scalar_lea.vmem [#allocation2], 8
    %29 = vst.msk [vmem:[%s28] sm:$0x1] %vm27, %v26
    %s30 = scalar_lea.vmem [#allocation3], 1
    %v31 = vld [vmem:[%s30] sm:$0x1]
    %32 = vrot.lane.b32.xlu0 %v31, 103
    %v33 = vpop.permute.xlu0 %32
    %vm34 = vcmask 138240
    %s35 = scalar_lea.vmem [#allocation2], 72
    %36 = vst.msk [vmem:[%s35] sm:$0x1] %vm34, %v33
    %v37 = vld [vmem:[#allocation3] sm:$0x1]
    %38 = vrot.lane.b32.xlu0 %v37, 94
    %v39 = vpop.permute.xlu0 %38
    %vm40 = vcmask 138240
    %s41 = scalar_lea.vmem [#allocation2], 16
    %42 = vst.msk [vmem:[%s41] sm:$0x1] %vm40, %v39
    %s43 = scalar_lea.vmem [#allocation3], 1
    %v44 = vld [vmem:[%s43] sm:$0x1]
    %45 = vrot.lane.b32.xlu0 %v44, 86
    %v46 = vpop.permute.xlu0 %45
    %vm47 = vcmask 138240
    %s48 = scalar_lea.vmem [#allocation2], 80
    %49 = vst.msk [vmem:[%s48] sm:$0x1] %vm47, %v46
    %v50 = vld [vmem:[#allocation3] sm:$0x1]
    %51 = vrot.lane.b32.xlu0 %v50, 77
    %v52 = vpop.permute.xlu0 %51
    %vm53 = vcmask 138240
    %s54 = scalar_lea.vmem [#allocation2], 24
    %55 = vst.msk [vmem:[%s54] sm:$0x1] %vm53, %v52
    %s56 = scalar_lea.vmem [#allocation3], 1
    %v57 = vld [vmem:[%s56] sm:$0x1]
    %58 = vrot.lane.b32.xlu0 %v57, 69
    %v59 = vpop.permute.xlu0 %58
    %vm60 = vcmask 138240
    %s61 = scalar_lea.vmem [#allocation2], 88
    %62 = vst.msk [vmem:[%s61] sm:$0x1] %vm60, %v59
    %v63 = vld [vmem:[#allocation3] sm:$0x1]
    %64 = vrot.lane.b32.xlu0 %v63, 60
    %v65 = vpop.permute.xlu0 %64
    %vm66 = vcmask 138240
    %s67 = scalar_lea.vmem [#allocation2], 32
    %68 = vst.msk [vmem:[%s67] sm:$0x1] %vm66, %v65
    %s69 = scalar_lea.vmem [#allocation3], 1
    %v70 = vld [vmem:[%s69] sm:$0x1]
    %71 = vrot.lane.b32.xlu0 %v70, 52
    %v72 = vpop.permute.xlu0 %71
    %vm73 = vcmask 138240
    %s74 = scalar_lea.vmem [#allocation2], 96
    %75 = vst.msk [vmem:[%s74] sm:$0x1] %vm73, %v72
    %v76 = vld [vmem:[#allocation3] sm:$0x1]
    %77 = vrot.lane.b32.xlu0 %v76, 43
    %v78 = vpop.permute.xlu0 %77
    %vm79 = vcmask 138240
    %s80 = scalar_lea.vmem [#allocation2], 40
    %81 = vst.msk [vmem:[%s80] sm:$0x1] %vm79, %v78
    %s82 = scalar_lea.vmem [#allocation3], 1
    %v83 = vld [vmem:[%s82] sm:$0x1]
    %84 = vrot.lane.b32.xlu0 %v83, 35
    %v85 = vpop.permute.xlu0 %84
    %vm86 = vcmask 138240
    %s87 = scalar_lea.vmem [#allocation2], 104
    %88 = vst.msk [vmem:[%s87] sm:$0x1] %vm86, %v85
    %v89 = vld [vmem:[#allocation3] sm:$0x1]
    %90 = vrot.lane.b32.xlu0 %v89, 26
    %v91 = vpop.permute.xlu0 %90
    %vm92 = vcmask 138240
    %s93 = scalar_lea.vmem [#allocation2], 48
    %94 = vst.msk [vmem:[%s93] sm:$0x1] %vm92, %v91
    %s95 = scalar_lea.vmem [#allocation3], 1
    %v96 = vld [vmem:[%s95] sm:$0x1]
    %97 = vrot.lane.b32.xlu0 %v96, 18
    %v98 = vpop.permute.xlu0 %97
    %vm99 = vcmask 138240
    %s100 = scalar_lea.vmem [#allocation2], 112
    %101 = vst.msk [vmem:[%s100] sm:$0x1] %vm99, %v98
    %v102 = vld [vmem:[#allocation3] sm:$0x1]
    %s103 = scalar_lea.vmem [#allocation3], 1
    %v104 = vld [vmem:[%s103] sm:$0x1]
    %vm105 = vcmask 973824
    %v106 = vsel %vm105, %v104, %v102
    %107 = vrot.lane.b32.xlu0 %v106, 9
    %v108 = vpop.permute.xlu0 %107
    %vm109 = vcmask 72704
    %s110 = scalar_lea.vmem [#allocation2], 56
    %111 = vst.msk [vmem:[%s110] sm:$0x1] %vm109, %v108
    %vm112 = vcmask 138312
    %s113 = scalar_lea.vmem [#allocation2], 56
    %114 = vst.msk [vmem:[%s113] sm:$0x1] %vm112, %v108
    %s115 = scalar_lea.vmem [#allocation3], 1
    %v116 = vld [vmem:[%s115] sm:$0x1]
    %s117 = scalar_lea.vmem [#allocation3], 2
    %v118 = vld [vmem:[%s117] sm:$0x1]
    %vm119 = vcmask 1039360
    %v120 = vsel %vm119, %v118, %v116
    %121 = vrot.lane.b32.xlu0 %v120, 1
    %v122 = vpop.permute.xlu0 %121
    %vm123 = vcmask 7168
    %s124 = scalar_lea.vmem [#allocation2], 120
    %125 = vst.msk [vmem:[%s124] sm:$0x1] %vm123, %v122
    %vm126 = vcmask 138248
    %s127 = scalar_lea.vmem [#allocation2], 120
    %128 = vst.msk [vmem:[%s127] sm:$0x1] %vm126, %v122
    %s130 = ssub.s32 2, 1
    %v131 = vld [vmem:[#allocation2] sm:%s130]
    %s133 = ssub.s32 2, 1
    %134 = vst [vmem:[#allocation0] sm:%s133] %v131
    %s135 = scalar_lea.vmem [#allocation2], 8
    %v136 = vld [vmem:[%s135] sm:%s130]
    %s138 = ssub.s32 2, 1
    %s139 = scalar_lea.vmem [#allocation0], 1
    %140 = vst [vmem:[%s139] sm:%s138] %v136
    %s141 = scalar_lea.vmem [#allocation2], 16
    %v142 = vld [vmem:[%s141] sm:%s130]
    %s144 = ssub.s32 2, 1
    %s145 = scalar_lea.vmem [#allocation0], 2
    %146 = vst [vmem:[%s145] sm:%s144] %v142
    %s147 = scalar_lea.vmem [#allocation2], 24
    %v148 = vld [vmem:[%s147] sm:%s130]
    %s150 = ssub.s32 2, 1
    %s151 = scalar_lea.vmem [#allocation0], 3
    %152 = vst [vmem:[%s151] sm:%s150] %v148
    %s153 = scalar_lea.vmem [#allocation2], 32
    %v154 = vld [vmem:[%s153] sm:%s130]
    %s156 = ssub.s32 2, 1
    %s157 = scalar_lea.vmem [#allocation0], 4
    %158 = vst [vmem:[%s157] sm:%s156] %v154
    %s159 = scalar_lea.vmem [#allocation2], 40
    %v160 = vld [vmem:[%s159] sm:%s130]
    %s162 = ssub.s32 2, 1
    %s163 = scalar_lea.vmem [#allocation0], 5
    %164 = vst [vmem:[%s163] sm:%s162] %v160
    %s165 = scalar_lea.vmem [#allocation2], 48
    %v166 = vld [vmem:[%s165] sm:%s130]
    %s168 = ssub.s32 2, 1
    %s169 = scalar_lea.vmem [#allocation0], 6
    %170 = vst [vmem:[%s169] sm:%s168] %v166
    %s171 = scalar_lea.vmem [#allocation2], 56
    %v172 = vld [vmem:[%s171] sm:%s130]
    %s174 = ssub.s32 2, 1
    %s175 = scalar_lea.vmem [#allocation0], 7
    %176 = vst [vmem:[%s175] sm:%s174] %v172
    %s177 = scalar_lea.vmem [#allocation2], 64
    %v178 = vld [vmem:[%s177] sm:%s130]
    %s180 = ssub.s32 2, 1
    %s181 = scalar_lea.vmem [#allocation0], 8
    %182 = vst [vmem:[%s181] sm:%s180] %v178
    %s183 = scalar_lea.vmem [#allocation2], 72
    %v184 = vld [vmem:[%s183] sm:%s130]
    %s186 = ssub.s32 2, 1
    %s187 = scalar_lea.vmem [#allocation0], 9
    %188 = vst [vmem:[%s187] sm:%s186] %v184
    %s189 = scalar_lea.vmem [#allocation2], 80
    %v190 = vld [vmem:[%s189] sm:%s130]
    %s192 = ssub.s32 2, 1
    %s193 = scalar_lea.vmem [#allocation0], 10
    %194 = vst [vmem:[%s193] sm:%s192] %v190
    %s195 = scalar_lea.vmem [#allocation2], 88
    %v196 = vld [vmem:[%s195] sm:%s130]
    %s198 = ssub.s32 2, 1
    %s199 = scalar_lea.vmem [#allocation0], 11
    %200 = vst [vmem:[%s199] sm:%s198] %v196
    %s201 = scalar_lea.vmem [#allocation2], 96
    %v202 = vld [vmem:[%s201] sm:%s130]
    %s204 = ssub.s32 2, 1
    %s205 = scalar_lea.vmem [#allocation0], 12
    %206 = vst [vmem:[%s205] sm:%s204] %v202
    %s207 = scalar_lea.vmem [#allocation2], 104
    %v208 = vld [vmem:[%s207] sm:%s130]
    %s210 = ssub.s32 2, 1
    %s211 = scalar_lea.vmem [#allocation0], 13
    %212 = vst [vmem:[%s211] sm:%s210] %v208
    %s213 = scalar_lea.vmem [#allocation2], 112
    %v214 = vld [vmem:[%s213] sm:%s130]
    %s216 = ssub.s32 2, 1
    %s217 = scalar_lea.vmem [#allocation0], 14
    %218 = vst [vmem:[%s217] sm:%s216] %v214
    %s219 = scalar_lea.vmem [#allocation2], 120
    %v220 = vld [vmem:[%s219] sm:%s130]
    %s222 = ssub.s32 2, 1
    %s223 = scalar_lea.vmem [#allocation0], 15
    %224 = vst [vmem:[%s223] sm:%s222] %v220
    %s225 = scalar_lea.vmem [#allocation2], 128
    %v226 = vld [vmem:[%s225] sm:%s130]
    %s228 = ssub.s32 2, 1
    %s229 = scalar_lea.vmem [#allocation0], 16
    %230 = vst [vmem:[%s229] sm:%s228] %v226
    %232 = vsyncadd [#allocation1], 0
    %s234 = sshll.u32 [#allocation0], 4
    %s235 = int_to_ptr.vmem [resolvable:$true] %s234
    %s236 = sshll.u32 %s1, 4
    %s237 = int_to_ptr.hbm [resolvable:$true] %s236
    %239 = dma.vmem_to_hbm [thread:$0]  %s235, 272, %s237, [#allocation1]
    %241 = dma.done [#allocation1], 272
    %242 = vsyncpa [#allocation1], 1

// kernel: forward.1
$region0: #{forward.1}
  #allocation0 [shape = 'u32[]', space=smem, size = 0x4, offset = 0x4, fixed_abs, tag = 'smem constant byte address 0x4 - core index']
  #allocation1 [shape = 'u32[72,128]{1,0:T(1,128)}', space=vmem, size = 0x9000, scoped, tag = 'internal scratch']
  %s0 = inlined_call_operand.hbm [shape: f32[1,16], index: 0, kind: input, shape index: {}]
  %s1 = inlined_call_operand.hbm [shape: f32[16,384], index: 1, kind: input, shape index: {}]
  %s2 = inlined_call_operand.hbm [shape: f32[8,384], index: 2, kind: input, shape index: {}]
  %s3 = inlined_call_operand.vmem [shape: f32[8,384], index: 3, kind: output, shape index: {}]
  %s4 = sld [smem:[#allocation0]]
  $region34: #{forward.1} parent=0
    _
  %s6 = ssub.s32 1, %s4
  %s7 = scalar_select 0, %s6, %s4
  $region1: #{forward.1} parent=0
    #allocation2 [shape = 'u8[512]{0}', space=vmem, size = 0x400, scoped, tag = 'input window, operand 0, single buffered']
    #allocation3 [shape = 's32[1]{0}', space=sflag, size = 0x4, scoped, tag = 'scoped memory for forward.1']
    #allocation4 [shape = 'u8[24576]{0}', space=vmem, size = 0x6000, scoped, tag = 'input window, operand 1, single buffered']
    #allocation5 [shape = 's32[1]{0}', space=sflag, size = 0x4, scoped, tag = 'scoped memory for forward.1']
    #allocation6 [shape = 'u8[12288]{0}', space=vmem, size = 0x3000, scoped, tag = 'input window, operand 2, single buffered']
    %8 = vsyncpa [#allocation3], 0
    %9 = vsyncpa [#allocation5], 0
    // Predicated region
    $region2: #{forward.1} parent=1 // pred_check
      _
    $region3: #{forward.1} parent=1 // pred_check_branch
      %11 = sbr.rel (0) target = $region5
    $region4: #{forward.1} parent=1 // pred_region
      %13 = vsyncadd [#allocation3], 0
      %s15 = sshll.u32 %s0, 4
      %s16 = int_to_ptr.hbm [resolvable:$true] %s15
      %s17 = sshll.u32 [#allocation2], 4
      %s18 = int_to_ptr.vmem [resolvable:$true] %s17
      %20 = dma.hbm_to_vmem [thread:$0]  %s16, 16, %s18, [#allocation3]
    $region5: #{forward.1} parent=1 // pred_fallthru
      _
    // Predicated region
    $region6: #{forward.1} parent=1 // pred_check
      _
    $region7: #{forward.1} parent=1 // pred_check_branch
      %22 = sbr.rel (0) target = $region9
    $region8: #{forward.1} parent=1 // pred_region
      %24 = vsyncadd [#allocation5], 0
      %s25 = sshll.u32 %s1, 4
      %s26 = int_to_ptr.hbm [resolvable:$true] %s25
      %s27 = sshll.u32 [#allocation4], 4
      %s28 = int_to_ptr.vmem [resolvable:$true] %s27
      %33 = dma.hbm_to_vmem [thread:$0]  %s26, 768, %s28, [#allocation5], 384, 384, 24
    $region9: #{forward.1} parent=1 // pred_fallthru
      _
    // Predicated region
    $region10: #{forward.1} parent=1 // pred_check
      _
    $region11: #{forward.1} parent=1 // pred_check_branch
      %35 = sbr.rel (0) target = $region13
    $region12: #{forward.1} parent=1 // pred_region
      %37 = vsyncadd [#allocation5], 0
      %s39 = sshll.u32 %s2, 4
      %s40 = int_to_ptr.hbm [resolvable:$true] %s39
      %s41 = sshll.u32 [#allocation6], 4
      %s42 = int_to_ptr.vmem [resolvable:$true] %s41
      %44 = dma.hbm_to_vmem [thread:$0]  %s40, 384, %s42, [#allocation5]
    $region13: #{forward.1} parent=1 // pred_fallthru
      _
    // Predicated region
    $region14: #{forward.1} parent=1 // pred_check
      _
    $region15: #{forward.1} parent=1 // pred_check_branch
      %46 = sbr.rel (0) target = $region17
    $region16: #{forward.1} parent=1 // pred_region
      %48 = dma.done [#allocation3], 16
    $region17: #{forward.1} parent=1 // pred_fallthru
      _
    // Predicated region
    $region18: #{forward.1} parent=1 // pred_check
      _
    $region19: #{forward.1} parent=1 // pred_check_branch
      %50 = sbr.rel (0) target = $region21
    $region20: #{forward.1} parent=1 // pred_region
      %52 = dma.done [#allocation5], 768
    $region21: #{forward.1} parent=1 // pred_fallthru
      _
    // Predicated region
    $region22: #{forward.1} parent=1 // pred_check
      _
    $region23: #{forward.1} parent=1 // pred_check_branch
      %54 = sbr.rel (0) target = $region25
    $region24: #{forward.1} parent=1 // pred_region
      %56 = dma.done [#allocation5], 384
    $region25: #{forward.1} parent=1 // pred_fallthru
      _
    %v57 = vld [vmem:[#allocation2] sm:$0x1]
    %v59 = vperm.slane %v57, 0
    %v60 = vld [vmem:[#allocation4] sm:$0xff]
    %v61 = vld [vmem:[#allocation4 + $0x8] sm:$0xff]
    %v62 = vld [vmem:[#allocation4 + $0x10] sm:$0xff]
    %v63 = vld [vmem:[#allocation4 + $0x18] sm:$0xff]
    %v64 = vld [vmem:[#allocation4 + $0x20] sm:$0xff]
    %v65 = vld [vmem:[#allocation4 + $0x28] sm:$0xff]
    %v66 = vld [vmem:[#allocation6] sm:$0xff]
    %v67 = vld [vmem:[#allocation6 + $0x8] sm:$0xff]
    %v68 = vld [vmem:[#allocation6 + $0x10] sm:$0xff]
    %vm69 = vcmask 130048
    %v70 = vsel %vm69, %v59, 0
    %72 = vmatpush.msra.mxu0 0.0
    %73 = vmatpush.msra.mxu0 0.0
    %74 = vmatpush.msra.mxu0 0.0
    %75 = vmatpush.msra.mxu0 0.0
    %76 = vmatpush.msra.mxu0 0.0
    %77 = vmatpush.msra.mxu0 0.0
    %78 = vmatpush.msra.mxu0 0.0
    %79 = vmatpush.msra.mxu0 0.0
    %80 = vmatpush.msra.mxu0 0.0
    %81 = vmatpush.msra.mxu0 0.0
    %82 = vmatpush.msra.mxu0 0.0
    %83 = vmatpush.msra.mxu0 0.0
    %84 = vmatpush.msra.mxu0 0.0
    %85 = vmatpush.msra.mxu0 0.0
    %86 = vmatpush.msra.mxu0 %v63
    %87 = vmatpush.msra.mxu0 %v60
    %88 = vmatmul.f32.gmra.mxu0 %v70
    %v89 = vpop.f32.mrf.mxu0
    %v90 = vadd.f32 %v66, %v89
    %91 = vdwg.mxu0
    %92 = vmatpush.msra.mxu0 0.0
    %93 = vmatpush.msra.mxu0 0.0
    %94 = vmatpush.msra.mxu0 0.0
    %95 = vmatpush.msra.mxu0 0.0
    %96 = vmatpush.msra.mxu0 0.0
    %97 = vmatpush.msra.mxu0 0.0
    %98 = vmatpush.msra.mxu0 0.0
    %99 = vmatpush.msra.mxu0 0.0
    %100 = vmatpush.msra.mxu0 0.0
    %101 = vmatpush.msra.mxu0 0.0
    %102 = vmatpush.msra.mxu0 0.0
    %103 = vmatpush.msra.mxu0 0.0
    %104 = vmatpush.msra.mxu0 0.0
    %105 = vmatpush.msra.mxu0 0.0
    %106 = vmatpush.msra.mxu0 %v64
    %107 = vmatpush.msra.mxu0 %v61
    %108 = vmatmul.f32.gmra.mxu0 %v70
    %v109 = vpop.f32.mrf.mxu0
    %v110 = vadd.f32 %v67, %v109
    %111 = vdwg.mxu0
    %112 = vmatpush.msra.mxu0 0.0
    %113 = vmatpush.msra.mxu0 0.0
    %114 = vmatpush.msra.mxu0 0.0
    %115 = vmatpush.msra.mxu0 0.0
    %116 = vmatpush.msra.mxu0 0.0
    %117 = vmatpush.msra.mxu0 0.0
    %118 = vmatpush.msra.mxu0 0.0
    %119 = vmatpush.msra.mxu0 0.0
    %120 = vmatpush.msra.mxu0 0.0
    %121 = vmatpush.msra.mxu0 0.0
    %122 = vmatpush.msra.mxu0 0.0
    %123 = vmatpush.msra.mxu0 0.0
    %124 = vmatpush.msra.mxu0 0.0
    %125 = vmatpush.msra.mxu0 0.0
    %126 = vmatpush.msra.mxu0 %v65
    %127 = vmatpush.msra.mxu0 %v62
    %128 = vmatmul.f32.gmra.mxu0 %v70
    %v129 = vpop.f32.mrf.mxu0
    %v130 = vadd.f32 %v68, %v129
    %131 = vdwg.mxu0
    %132 = vst [vmem:[%s3] sm:$0xff] %v90
    %133 = vst [vmem:[%s3 + $0x8] sm:$0xff] %v110
    %134 = vst [vmem:[%s3 + $0x10] sm:$0xff] %v130
    // Predicated region
    $region26: #{forward.1} parent=1 // pred_check
      _
    $region27: #{forward.1} parent=1 // pred_check_branch
      %136 = sbr.rel (0) target = $region29
    $region28: #{forward.1} parent=1 // pred_region
      _
    $region29: #{forward.1} parent=1 // pred_fallthru
      _
    // Predicated region
    $region30: #{forward.1} parent=1 // pred_check
      _
    $region31: #{forward.1} parent=1 // pred_check_branch
      %138 = sbr.rel (0) target = $region33
    $region32: #{forward.1} parent=1 // pred_region
      _
    $region33: #{forward.1} parent=1 // pred_fallthru
      _
    %139 = vsyncpa [#allocation3], 1
    %140 = vsyncpa [#allocation5], 1

</llo_original>
